<compile_context>
chip_gen: v7x
topology: tpu7x:2x2x1
jax: 0.10.0
libtpu: 0.0.40
codegen_flags: <defaults>
</compile_context>

<pallas_src>
import jax
import jax.numpy as jnp
from jax.experimental import pallas as pl
from jax.experimental.pallas import tpu as pltpu


def _probe_kernel(xq_ref, xk_ref, wt_ref, b_ref, lab_ref, score_ref, loss_ref):
    # xq_ref : (tb*tq, H) bf16  -- query rows (batch folded into the MXU M dim)
    # xk_ref : (tb*S,  H) bf16  -- key rows (full S per batch element, resident across q)
    # wt_ref : (H, H)     bf16  -- qa_outputs weight, pre-transposed (y = x @ W^T + b)
    # b_ref  : (1, H)     f32
    # lab_ref: (tb, tq, S) bf16 -- edge labels in {0, 1}
    tb, tq, S = score_ref.shape

    # GEMM 1: one (tb*tq, H) x (H, H) bf16 matmul with f32 accumulation.
    y = jnp.dot(xq_ref[...], wt_ref[...], preferred_element_type=jnp.float32)
    tmp = jnp.tanh(y + b_ref[...])                                  # (tb*tq, H) f32

    loss_part = jnp.zeros((1, S), dtype=jnp.float32)

    for i in range(tb):  # static unroll; the score GEMM is inherently per-batch-element
        tmp_i = tmp[i * tq:(i + 1) * tq, :].astype(jnp.bfloat16)    # (tq, H)
        xk_i = xk_ref[pl.ds(i * S, S), :]                           # (S, H) bf16
        # Contract last dims of both operands (MXU-native "trans_b"): no XLU transpose.
        z = jax.lax.dot_general(
            tmp_i, xk_i,
            dimension_numbers=(((1,), (1,)), ((), ())),
            preferred_element_type=jnp.float32)                     # (tq, S) f32
        p = jax.nn.sigmoid(z)
        score_ref[i] = p

        # CrossEntropy on logits [1-p, p] with label y reduces to softplus((1-2y)(2p-1));
        # logits are bounded in [0, 1], so no max trick / where / extra exps needed.
        lab = lab_ref[i].astype(jnp.float32)                        # (tq, S)
        t = (1.0 - 2.0 * lab) * (2.0 * p - 1.0)
        loss_part = loss_part + jnp.sum(jnp.log(1.0 + jnp.exp(t)),
                                        axis=0, keepdims=True)

    # Lane-partial (width S) loss sum for this block; final mean done in JAX glue.
    loss_ref[...] = loss_part.reshape(1, 1, S)


def _pick_tiles(B, S):
    """Choose (tb, tq).  Invariant: tb > 1 only when tq == S, so that blocks of the
    flattened (B*S, H) activations are contiguous."""
    # q tile: full S unless S is large (bounds the (tq, S) score/label planes in VMEM).
    tq = S
    if S > 512:
        for d in range(512, 0, -1):
            if S % d == 0:
                tq = d
                break
    # batch tile: fold batch into GEMM-1's M dim only when the q range fits in one tile.
    tb = 1
    if tq == S:
        cap = max(1, 128 // max(S, 1))
        for d in range(min(B, cap), 0, -1):
            if B % d == 0:
                tb = d
                break
    # Block-shape legality ((8,128) rule): fall back to full-extent blocks if needed.
    q_ok = (tq == S) or (tq % 8 == 0)
    m_ok = ((tb * tq) % 8 == 0) or (tb == B and tq == S)
    if not (q_ok and m_ok):
        tb, tq = B, S
    return tb, tq


def probe_forward(sequence_output, qa_weight, qa_bias, edge_labels, *, tb=None, tq=None):
    """Pallas equivalent of ProbeModel.forward *after* the frozen encoder.

    sequence_output: (B, S, H) float32
    qa_weight:       (H, H)    float32  (PyTorch Linear weight, out x in)
    qa_bias:         (H,)      float32
    edge_labels:     (B, S, S) integer {0, 1}
    returns (masked_graph_loss, score)
    """
    B, S, H = sequence_output.shape
    if tb is None or tq is None:
        tb, tq = _pick_tiles(B, S)
    nb, nq = B // tb, S // tq

    # bf16 matmul operands (half HBM traffic, bf16-native MXU); labels as bf16
    # ({0,1} exact, 2 bytes/elem instead of 4); f32 accumulation & elementwise in-kernel.
    x_flat = sequence_output.reshape(B * S, H).astype(jnp.bfloat16)
    wt = qa_weight.T.astype(jnp.bfloat16)               # kernel computes x @ W^T + b
    bias2d = qa_bias.reshape(1, H).astype(jnp.float32)
    lab = edge_labels.astype(jnp.bfloat16)

    score, loss_part = pl.pallas_call(
        _probe_kernel,
        out_shape=(
            jax.ShapeDtypeStruct((B, S, S), jnp.float32),
            jax.ShapeDtypeStruct((nb, nq, S), jnp.float32),
        ),
        grid_spec=pltpu.PrefetchScalarGridSpec(
            num_scalar_prefetch=0,
            grid=(nb, nq),
            in_specs=[
                # query rows: (tb*tq, H) slab of the flattened activations
                pl.BlockSpec((tb * tq, H), lambda b, q: (b * nq + q, 0)),
                # key rows: (tb*S, H) slab; constant across q -> fetched once per b
                pl.BlockSpec((tb * S, H), lambda b, q: (b, 0)),
                pl.BlockSpec((H, H), lambda b, q: (0, 0)),          # W^T
                pl.BlockSpec((1, H), lambda b, q: (0, 0)),          # bias
                pl.BlockSpec((tb, tq, S), lambda b, q: (b, q, 0)),  # edge labels
            ],
            out_specs=(
                pl.BlockSpec((tb, tq, S), lambda b, q: (b, q, 0)),  # score
                pl.BlockSpec((1, 1, S), lambda b, q: (b, q, 0)),    # loss lane-partials
            ),
        ),
        compiler_params=pltpu.CompilerParams(
            dimension_semantics=("parallel", "parallel"),
            vmem_limit_bytes=64 * 1024 * 1024,
        ),
    )(x_flat, x_flat, wt, bias2d, lab)

    # CrossEntropyLoss default reduction='mean' over all B*S*S elements (glue).
    masked_graph_loss = jnp.sum(loss_part) / (B * S * S)
    return masked_graph_loss, score


if __name__ == "__main__":
    # Small shapes consistent with the module: batch=2, seq=8, nhid=32, encoder input dim=16.
    B, S, D_IN, NHID = 2, 8, 16, 32

    key = jax.random.PRNGKey(0)
    k_inp, k_enc, k_w, k_b, k_lab = jax.random.split(key, 5)

    # TODO(synk): the real encoder is external & frozen; replaced here by a deterministic
    # synthetic linear+tanh encoder in plain JAX (glue, not the kernel's job).
    inps = jax.random.normal(k_inp, (B, S, D_IN), dtype=jnp.float32)
    w_enc = jax.random.normal(k_enc, (D_IN, NHID), dtype=jnp.float32) * 0.1
    sequence_output = jnp.tanh(inps @ w_enc)                    # (B, S, NHID)

    # qa_outputs = nn.Linear(nhid, nhid) — deterministic init.
    qa_weight = jax.random.normal(k_w, (NHID, NHID), dtype=jnp.float32) * 0.05
    qa_bias = jax.random.normal(k_b, (NHID,), dtype=jnp.float32) * 0.05

    # edge_labels in {0, 1}, shape (B, S, S)
    edge_labels = jax.random.bernoulli(k_lab, 0.3, (B, S, S)).astype(jnp.int32)

    loss, score = probe_forward(sequence_output, qa_weight, qa_bias, edge_labels)
    jax.block_until_ready((loss, score))
    print("KERNEL_OK")
</pallas_src>

<mosaic_0001>
module attributes {stable_mosaic.version = 11 : i64} {
  func.func @_probe_kernel(%arg0: i32, %arg1: i32, %arg2: memref<16x32xbf16, #tpu.memory_space<vmem>>, %arg3: memref<16x32xbf16, #tpu.memory_space<vmem>>, %arg4: memref<32x32xbf16, #tpu.memory_space<vmem>>, %arg5: memref<1x32xf32, #tpu.memory_space<vmem>>, %arg6: memref<2x8x8xbf16, #tpu.memory_space<vmem>>, %arg7: memref<2x8x8xf32, #tpu.memory_space<vmem>>, %arg8: memref<1x1x8xf32, #tpu.memory_space<vmem>>) attributes {dimension_semantics = [#tpu.dimension_semantics<parallel>, #tpu.dimension_semantics<parallel>], iteration_bounds = array<i64: 1, 1>, scalar_prefetch = 0 : i64, scratch_operands = 0 : i64, tpu.core_type = #tpu.core_type<tc>, window_params = [{transform_indices = @transform_0, window_bounds = array<i64: 16, 32>}, {transform_indices = @transform_1, window_bounds = array<i64: 16, 32>}, {pipeline_mode = #tpu.pipeline_mode<synchronous>, transform_indices = @transform_2, window_bounds = array<i64: 32, 32>}, {pipeline_mode = #tpu.pipeline_mode<synchronous>, transform_indices = @transform_3, window_bounds = array<i64: 1, 32>}, {transform_indices = @transform_4, window_bounds = array<i64: 2, 8, 8>}, {transform_indices = @transform_5, window_bounds = array<i64: 2, 8, 8>}, {transform_indices = @transform_6, window_bounds = array<i64: 1, 1, 8>}]} {
    %c0 = arith.constant 0 : index
    %c0_0 = arith.constant 0 : index
    %0 = vector.load %arg2[%c0, %c0_0] : memref<16x32xbf16, #tpu.memory_space<vmem>>, vector<16x32xbf16>
    %c0_1 = arith.constant 0 : index
    %c0_2 = arith.constant 0 : index
    %1 = vector.load %arg4[%c0_1, %c0_2] : memref<32x32xbf16, #tpu.memory_space<vmem>>, vector<32x32xbf16>
    %cst = arith.constant dense<0.000000e+00> : vector<16x32xf32>
    %2 = tpu.matmul %0, %1, %cst {dimension_numbers = #tpu.dot_dimension_numbers<[1], [0], [0], [1], [0, 0, 1, 1], [], []>} : vector<16x32xbf16>, vector<32x32xbf16>, vector<16x32xf32> -> vector<16x32xf32>
    %c0_3 = arith.constant 0 : index
    %c0_4 = arith.constant 0 : index
    %3 = vector.load %arg5[%c0_3, %c0_4] : memref<1x32xf32, #tpu.memory_space<vmem>>, vector<1x32xf32>
    %4 = vector.broadcast %3 : vector<1x32xf32> to vector<16x32xf32>
    %5 = arith.addf %2, %4 : vector<16x32xf32>
    %6 = math.tanh %5 : vector<16x32xf32>
    %cst_5 = arith.constant 0.000000e+00 : f32
    %7 = vector.broadcast %cst_5 : f32 to vector<1x8xf32>
    %8 = vector.extract_strided_slice %6 {offsets = [0, 0], sizes = [8, 32], strides = [1, 1]} : vector<16x32xf32> to vector<8x32xf32>
    %9 = arith.truncf %8 : vector<8x32xf32> to vector<8x32xbf16>
    %c0_6 = arith.constant 0 : index
    %c0_7 = arith.constant 0 : index
    %10 = vector.load %arg3[%c0_6, %c0_7] : memref<16x32xbf16, #tpu.memory_space<vmem>>, vector<8x32xbf16>
    %cst_8 = arith.constant dense<0.000000e+00> : vector<8x8xf32>
    %11 = tpu.matmul %9, %10, %cst_8 {dimension_numbers = #tpu.dot_dimension_numbers<[1], [1], [0], [0], [0, 0, 1, 0], [], []>} : vector<8x32xbf16>, vector<8x32xbf16>, vector<8x8xf32> -> vector<8x8xf32>
    %12 = arith.negf %11 : vector<8x8xf32>
    %13 = math.exp %12 : vector<8x8xf32>
    %cst_9 = arith.constant 1.000000e+00 : f32
    %14 = vector.broadcast %cst_9 : f32 to vector<8x8xf32>
    %15 = arith.addf %14, %13 : vector<8x8xf32>
    %16 = arith.divf %14, %15 : vector<8x8xf32>
    %c0_10 = arith.constant 0 : index
    %c0_11 = arith.constant 0 : index
    %c0_12 = arith.constant 0 : index
    %17 = vector.load %arg7[%c0_10, %c0_11, %c0_12] : memref<2x8x8xf32, #tpu.memory_space<vmem>>, vector<1x8x8xf32>
    %18 = vector.shape_cast %17 : vector<1x8x8xf32> to vector<8x8xf32>
    %19 = vector.shape_cast %16 : vector<8x8xf32> to vector<1x8x8xf32>
    tpu.vector_store %arg7[%c0_10, %c0_11, %c0_12], %19 {strides = array<i32>} : memref<2x8x8xf32, #tpu.memory_space<vmem>>, vector<1x8x8xf32>,
    %c0_13 = arith.constant 0 : index
    %c0_14 = arith.constant 0 : index
    %c0_15 = arith.constant 0 : index
    %20 = vector.load %arg6[%c0_13, %c0_14, %c0_15] : memref<2x8x8xbf16, #tpu.memory_space<vmem>>, vector<1x8x8xbf16>
    %21 = vector.shape_cast %20 : vector<1x8x8xbf16> to vector<8x8xbf16>
    %22 = arith.extf %21 : vector<8x8xbf16> to vector<8x8xf32>
    %cst_16 = arith.constant 2.000000e+00 : f32
    %23 = vector.broadcast %cst_16 : f32 to vector<8x8xf32>
    %24 = arith.mulf %23, %22 : vector<8x8xf32>
    %cst_17 = arith.constant 1.000000e+00 : f32
    %25 = vector.broadcast %cst_17 : f32 to vector<8x8xf32>
    %26 = arith.subf %25, %24 : vector<8x8xf32>
    %cst_18 = arith.constant 2.000000e+00 : f32
    %27 = vector.broadcast %cst_18 : f32 to vector<8x8xf32>
    %28 = arith.mulf %27, %16 : vector<8x8xf32>
    %cst_19 = arith.constant 1.000000e+00 : f32
    %29 = vector.broadcast %cst_19 : f32 to vector<8x8xf32>
    %30 = arith.subf %28, %29 : vector<8x8xf32>
    %31 = arith.mulf %26, %30 : vector<8x8xf32>
    %32 = math.exp %31 : vector<8x8xf32>
    %cst_20 = arith.constant 1.000000e+00 : f32
    %33 = vector.broadcast %cst_20 : f32 to vector<8x8xf32>
    %34 = arith.addf %33, %32 : vector<8x8xf32>
    %35 = math.log %34 : vector<8x8xf32>
    %cst_21 = arith.constant dense<0.000000e+00> : vector<8xf32>
    %36 = vector.multi_reduction <add>, %35, %cst_21 [0] : vector<8x8xf32> to vector<8xf32>
    %37 = vector.shape_cast %36 : vector<8xf32> to vector<1x8xf32>
    %38 = arith.addf %7, %37 : vector<1x8xf32>
    %39 = vector.extract_strided_slice %6 {offsets = [8, 0], sizes = [8, 32], strides = [1, 1]} : vector<16x32xf32> to vector<8x32xf32>
    %40 = arith.truncf %39 : vector<8x32xf32> to vector<8x32xbf16>
    %c8 = arith.constant 8 : index
    %c0_22 = arith.constant 0 : index
    %41 = vector.load %arg3[%c8, %c0_22] : memref<16x32xbf16, #tpu.memory_space<vmem>>, vector<8x32xbf16>
    %cst_23 = arith.constant dense<0.000000e+00> : vector<8x8xf32>
    %42 = tpu.matmul %40, %41, %cst_23 {dimension_numbers = #tpu.dot_dimension_numbers<[1], [1], [0], [0], [0, 0, 1, 0], [], []>} : vector<8x32xbf16>, vector<8x32xbf16>, vector<8x8xf32> -> vector<8x8xf32>
    %43 = arith.negf %42 : vector<8x8xf32>
    %44 = math.exp %43 : vector<8x8xf32>
    %cst_24 = arith.constant 1.000000e+00 : f32
    %45 = vector.broadcast %cst_24 : f32 to vector<8x8xf32>
    %46 = arith.addf %45, %44 : vector<8x8xf32>
    %47 = arith.divf %45, %46 : vector<8x8xf32>
    %c1 = arith.constant 1 : index
    %c0_25 = arith.constant 0 : index
    %c0_26 = arith.constant 0 : index
    %48 = vector.load %arg7[%c1, %c0_25, %c0_26] : memref<2x8x8xf32, #tpu.memory_space<vmem>>, vector<1x8x8xf32>
    %49 = vector.shape_cast %48 : vector<1x8x8xf32> to vector<8x8xf32>
    %50 = vector.shape_cast %47 : vector<8x8xf32> to vector<1x8x8xf32>
    tpu.vector_store %arg7[%c1, %c0_25, %c0_26], %50 {strides = array<i32>} : memref<2x8x8xf32, #tpu.memory_space<vmem>>, vector<1x8x8xf32>,
    %c1_27 = arith.constant 1 : index
    %c0_28 = arith.constant 0 : index
    %c0_29 = arith.constant 0 : index
    %51 = vector.load %arg6[%c1_27, %c0_28, %c0_29] : memref<2x8x8xbf16, #tpu.memory_space<vmem>>, vector<1x8x8xbf16>
    %52 = vector.shape_cast %51 : vector<1x8x8xbf16> to vector<8x8xbf16>
    %53 = arith.extf %52 : vector<8x8xbf16> to vector<8x8xf32>
    %cst_30 = arith.constant 2.000000e+00 : f32
    %54 = vector.broadcast %cst_30 : f32 to vector<8x8xf32>
    %55 = arith.mulf %54, %53 : vector<8x8xf32>
    %cst_31 = arith.constant 1.000000e+00 : f32
    %56 = vector.broadcast %cst_31 : f32 to vector<8x8xf32>
    %57 = arith.subf %56, %55 : vector<8x8xf32>
    %cst_32 = arith.constant 2.000000e+00 : f32
    %58 = vector.broadcast %cst_32 : f32 to vector<8x8xf32>
    %59 = arith.mulf %58, %47 : vector<8x8xf32>
    %cst_33 = arith.constant 1.000000e+00 : f32
    %60 = vector.broadcast %cst_33 : f32 to vector<8x8xf32>
    %61 = arith.subf %59, %60 : vector<8x8xf32>
    %62 = arith.mulf %57, %61 : vector<8x8xf32>
    %63 = math.exp %62 : vector<8x8xf32>
    %cst_34 = arith.constant 1.000000e+00 : f32
    %64 = vector.broadcast %cst_34 : f32 to vector<8x8xf32>
    %65 = arith.addf %64, %63 : vector<8x8xf32>
    %66 = math.log %65 : vector<8x8xf32>
    %cst_35 = arith.constant dense<0.000000e+00> : vector<8xf32>
    %67 = vector.multi_reduction <add>, %66, %cst_35 [0] : vector<8x8xf32> to vector<8xf32>
    %68 = vector.shape_cast %67 : vector<8xf32> to vector<1x8xf32>
    %69 = arith.addf %38, %68 : vector<1x8xf32>
    %70 = vector.shape_cast %69 : vector<1x8xf32> to vector<1x1x8xf32>
    %c0_36 = arith.constant 0 : index
    %c0_37 = arith.constant 0 : index
    %c0_38 = arith.constant 0 : index
    %71 = vector.load %arg8[%c0_36, %c0_37, %c0_38] : memref<1x1x8xf32, #tpu.memory_space<vmem>>, vector<1x1x8xf32>
    tpu.vector_store %arg8[%c0_36, %c0_37, %c0_38], %70 {strides = array<i32>} : memref<1x1x8xf32, #tpu.memory_space<vmem>>, vector<1x1x8xf32>,
    return
  }
  func.func @transform_0(%arg0: i32, %arg1: i32) -> (i32, i32) {
    %c1_i32 = arith.constant 1 : i32
    %0 = arith.muli %arg0, %c1_i32 : i32
    %1 = arith.addi %0, %arg1 : i32
    %c0_i32 = arith.constant 0 : i32
    %c0_i32_0 = arith.constant 0 : i32
    return %1, %c0_i32 : i32, i32
  }
  func.func @transform_1(%arg0: i32, %arg1: i32) -> (i32, i32) {
    %c0_i32 = arith.constant 0 : i32
    %c0_i32_0 = arith.constant 0 : i32
    return %arg0, %c0_i32 : i32, i32
  }
  func.func @transform_2(%arg0: i32, %arg1: i32) -> (i32, i32) {
    %c0_i32 = arith.constant 0 : i32
    %c0_i32_0 = arith.constant 0 : i32
    %c0_i32_1 = arith.constant 0 : i32
    return %c0_i32, %c0_i32_0 : i32, i32
  }
  func.func @transform_3(%arg0: i32, %arg1: i32) -> (i32, i32) {
    %c0_i32 = arith.constant 0 : i32
    %c0_i32_0 = arith.constant 0 : i32
    %c0_i32_1 = arith.constant 0 : i32
    return %c0_i32, %c0_i32_0 : i32, i32
  }
  func.func @transform_4(%arg0: i32, %arg1: i32) -> (i32, i32, i32) {
    %c0_i32 = arith.constant 0 : i32
    %c0_i32_0 = arith.constant 0 : i32
    return %arg0, %arg1, %c0_i32 : i32, i32, i32
  }
  func.func @transform_5(%arg0: i32, %arg1: i32) -> (i32, i32, i32) {
    %c0_i32 = arith.constant 0 : i32
    %c0_i32_0 = arith.constant 0 : i32
    return %arg0, %arg1, %c0_i32 : i32, i32, i32
  }
  func.func @transform_6(%arg0: i32, %arg1: i32) -> (i32, i32, i32) {
    %c0_i32 = arith.constant 0 : i32
    %c0_i32_0 = arith.constant 0 : i32
    return %arg0, %arg1, %c0_i32 : i32, i32, i32
  }
}

</mosaic_0001>

<llo_original>
// kernel: tpu_custom_call.1
$region0: #{tpu_custom_call.1}
  #allocation0 [shape = 'u32[]', space=smem, size = 0x4, offset = 0x4, fixed_abs, tag = 'smem constant byte address 0x4 - core index']
  #allocation1 [shape = 'u32[144,128]{1,0:T(1,128)}', space=vmem, size = 0x12000, scoped, tag = 'internal scratch']
  %s0 = inlined_call_operand.hbm [shape: bf16[16,32], index: 0, kind: input, shape index: {}]
  %s1 = inlined_call_operand.hbm [shape: bf16[16,32], index: 1, kind: input, shape index: {}]
  %s2 = inlined_call_operand.hbm [shape: bf16[32,32], index: 2, kind: input, shape index: {}]
  %s3 = inlined_call_operand.hbm [shape: f32[1,32], index: 3, kind: input, shape index: {}]
  %s4 = inlined_call_operand.hbm [shape: bf16[2,8,8], index: 4, kind: input, shape index: {}]
  %s5 = inlined_call_operand.hbm [shape: f32[2,8,8], index: 5, kind: output, shape index: {0}]
  %s6 = inlined_call_operand.hbm [shape: f32[1,1,8], index: 6, kind: output, shape index: {1}]
  %7 = xla_tuple %s5, %s6
  %s8 = sld [smem:[#allocation0]]
  $region58: #{tpu_custom_call.1} parent=0
    _
  %s10 = ssub.s32 1, %s8
  %s11 = scalar_select 0, %s10, %s8
  $region1: #{tpu_custom_call.1} parent=0
    #allocation2 [shape = 'u8[4096]{0}', space=vmem, size = 0x1000, scoped, tag = 'input window, operand 0, single buffered']
    #allocation3 [shape = 's32[1]{0}', space=sflag, size = 0x4, scoped, tag = 'scoped memory for tpu_custom_call.1']
    #allocation4 [shape = 's32[1]{0}', space=sflag, size = 0x4, scoped, tag = 'scoped memory for tpu_custom_call.1']
    #allocation5 [shape = 'u8[4096]{0}', space=vmem, size = 0x1000, scoped, tag = 'input window, operand 1, single buffered']
    #allocation6 [shape = 's32[1]{0}', space=sflag, size = 0x4, scoped, tag = 'scoped memory for tpu_custom_call.1']
    #allocation7 [shape = 'u8[8192]{0}', space=vmem, size = 0x2000, scoped, tag = 'input window, operand 2, single buffered']
    #allocation8 [shape = 'u8[512]{0}', space=vmem, size = 0x400, scoped, tag = 'input window, operand 3, single buffered']
    #allocation9 [shape = 's32[1]{0}', space=sflag, size = 0x4, scoped, tag = 'scoped memory for tpu_custom_call.1']
    #allocation10 [shape = 'u8[4096]{0}', space=vmem, size = 0x1000, scoped, tag = 'input window, operand 4, single buffered']
    #allocation11 [shape = 'u8[8192]{0}', space=vmem, size = 0x2000, scoped, tag = 'output window, operand 0, single buffered']
    #allocation12 [shape = 'u8[512]{0}', space=vmem, size = 0x400, scoped, tag = 'output window, operand 1, single buffered']
    #allocation13 [shape = 's32[1]{0}', space=sflag, size = 0x4, scoped, tag = 'scoped memory for tpu_custom_call.1']
    %12 = vsyncpa [#allocation3], 0
    %13 = vsyncpa [#allocation6], 0
    %14 = vsyncpa [#allocation9], 0
    %15 = vsyncpa [#allocation4], 0
    %16 = vsyncpa [#allocation13], 0
    // Predicated region
    $region2: #{tpu_custom_call.1} parent=1 // pred_check
      _
    $region3: #{tpu_custom_call.1} parent=1 // pred_check_branch
      %18 = sbr.rel (0) target = $region5
    $region4: #{tpu_custom_call.1} parent=1 // pred_region
      %s19 = sadd.s32 0, 0
      %s20 = smul.u32 2, %s19
      %s22 = ssub.s32 128, 128
      %23 = vsyncadd [#allocation3], %s22
      %s24 = smul.addr %s20, 64
      %s25 = scalar_lea.hbm %s0, %s24
      %s26 = sshll.u32 [#allocation2], 4
      %s27 = int_to_ptr.vmem [resolvable:$true] %s26
      %32 = dma.hbm_to_vmem [thread:$0]  %s25, 128, %s27, [#allocation3], 64, 64, 4
    $region5: #{tpu_custom_call.1} parent=1 // pred_fallthru
      _
    // Predicated region
    $region6: #{tpu_custom_call.1} parent=1 // pred_check
      _
    $region7: #{tpu_custom_call.1} parent=1 // pred_check_branch
      %34 = sbr.rel (0) target = $region9
    $region8: #{tpu_custom_call.1} parent=1 // pred_region
      %s36 = ssub.s32 128, 128
      %37 = vsyncadd [#allocation6], %s36
      %s38 = sshll.u32 [#allocation5], 4
      %s39 = int_to_ptr.vmem [resolvable:$true] %s38
      %44 = dma.hbm_to_vmem [thread:$0]  %s1, 128, %s39, [#allocation6], 64, 64, 4
    $region9: #{tpu_custom_call.1} parent=1 // pred_fallthru
      _
    // Predicated region
    $region10: #{tpu_custom_call.1} parent=1 // pred_check
      _
    $region11: #{tpu_custom_call.1} parent=1 // pred_check_branch
      %46 = sbr.rel (0) target = $region13
    $region12: #{tpu_custom_call.1} parent=1 // pred_region
      %s48 = ssub.s32 256, 256
      %49 = vsyncadd [#allocation6], %s48
      %s50 = sshll.u32 [#allocation7], 4
      %s51 = int_to_ptr.vmem [resolvable:$true] %s50
      %56 = dma.hbm_to_vmem [thread:$0]  %s2, 256, %s51, [#allocation6], 64, 64, 4
    $region13: #{tpu_custom_call.1} parent=1 // pred_fallthru
      _
    // Predicated region
    $region14: #{tpu_custom_call.1} parent=1 // pred_check
      _
    $region15: #{tpu_custom_call.1} parent=1 // pred_check_branch
      %58 = sbr.rel (0) target = $region17
    $region16: #{tpu_custom_call.1} parent=1 // pred_region
      %s60 = ssub.s32 16, 16
      %61 = vsyncadd [#allocation9], %s60
      %s63 = sshll.u32 [#allocation8], 4
      %s64 = int_to_ptr.vmem [resolvable:$true] %s63
      %66 = dma.hbm_to_vmem [thread:$0]  %s3, 16, %s64, [#allocation9]
    $region17: #{tpu_custom_call.1} parent=1 // pred_fallthru
      _
    // Predicated region
    $region18: #{tpu_custom_call.1} parent=1 // pred_check
      _
    $region19: #{tpu_custom_call.1} parent=1 // pred_check_branch
      %68 = sbr.rel (0) target = $region21
    $region20: #{tpu_custom_call.1} parent=1 // pred_region
      %s70 = ssub.s32 128, 128
      %71 = vsyncadd [#allocation9], %s70
      %s72 = sshll.u32 [#allocation10], 4
      %s73 = int_to_ptr.vmem [resolvable:$true] %s72
      %78 = dma.hbm_to_vmem [thread:$0]  %s4, 128, %s73, [#allocation9], 64, 64, 4
    $region21: #{tpu_custom_call.1} parent=1 // pred_fallthru
      _
    // Predicated region
    $region22: #{tpu_custom_call.1} parent=1 // pred_check
      _
    $region23: #{tpu_custom_call.1} parent=1 // pred_check_branch
      %80 = sbr.rel (0) target = $region25
    $region24: #{tpu_custom_call.1} parent=1 // pred_region
      %81 = dma.done [#allocation3], 128
    $region25: #{tpu_custom_call.1} parent=1 // pred_fallthru
      _
    // Predicated region
    $region26: #{tpu_custom_call.1} parent=1 // pred_check
      _
    $region27: #{tpu_custom_call.1} parent=1 // pred_check_branch
      %83 = sbr.rel (0) target = $region29
    $region28: #{tpu_custom_call.1} parent=1 // pred_region
      %84 = dma.done [#allocation6], 128
    $region29: #{tpu_custom_call.1} parent=1 // pred_fallthru
      _
    // Predicated region
    $region30: #{tpu_custom_call.1} parent=1 // pred_check
      _
    $region31: #{tpu_custom_call.1} parent=1 // pred_check_branch
      %86 = sbr.rel (0) target = $region33
    $region32: #{tpu_custom_call.1} parent=1 // pred_region
      %87 = dma.done [#allocation6], 256
    $region33: #{tpu_custom_call.1} parent=1 // pred_fallthru
      _
    // Predicated region
    $region34: #{tpu_custom_call.1} parent=1 // pred_check
      _
    $region35: #{tpu_custom_call.1} parent=1 // pred_check_branch
      %89 = sbr.rel (0) target = $region37
    $region36: #{tpu_custom_call.1} parent=1 // pred_region
      %90 = dma.done [#allocation9], 16
    $region37: #{tpu_custom_call.1} parent=1 // pred_fallthru
      _
    // Predicated region
    $region38: #{tpu_custom_call.1} parent=1 // pred_check
      _
    $region39: #{tpu_custom_call.1} parent=1 // pred_check_branch
      %92 = sbr.rel (0) target = $region41
    $region40: #{tpu_custom_call.1} parent=1 // pred_region
      %93 = dma.done [#allocation9], 128
    $region41: #{tpu_custom_call.1} parent=1 // pred_fallthru
      _
    %s94 = sadd.s32 0, 0
    %s95 = smul.u32 2, %s94
    %v97 = vld [vmem:[#allocation2] sm:$0xf]
    %v98 = vld [vmem:[#allocation2 + $0x4] sm:$0xf]
    %v99 = vld [vmem:[#allocation7] sm:$0xf]
    %v100 = vld [vmem:[#allocation7 + $0x4] sm:$0xf]
    %v101 = vld [vmem:[#allocation7 + $0x8] sm:$0xf]
    %v102 = vld [vmem:[#allocation7 + $0xc] sm:$0xf]
    %v103 = vld [vmem:[#allocation8] sm:$0x1]
    %v105 = vlaneseq
    %v106 = vshrl.u32 %v105, 7
    %v107 = vsub.s32 0, %v106
    %v108 = vrot.slane %v103, %v107
    %v112 = vunpack.c.l.b16 %v97
    %v113 = vunpack.c.l.b16 %v98
    %v114 = vpack.c.b16 %v113, %v112
    %v119 = vunpack.c.l.b16 %v99
    %v120 = vunpack.c.l.b16 %v100
    %v121 = vunpack.c.l.b16 %v101
    %v122 = vunpack.c.l.b16 %v102
    %v123 = vpack.c.b16 %v120, %v119
    %v124 = vpack.c.b16 %v122, %v121
    %vm127 = vcmask 261120
    %v129 = vsel %vm127, %v114, 0
    %131 = vmatprep.subr.bf16.mxu0 0
    %132 = vmatpush1.bf16.msra.mxu0 %v123
    %133 = vmatprep.subr.bf16.mxu0 0
    %134 = vmatpush1.bf16.msra.mxu0 %v124
    %135 = vmatprep.subr.bf16.mxu0 0
    %136 = vmatpush1.bf16.msra.mxu0 0
    %137 = vmatprep.subr.bf16.mxu0 0
    %138 = vmatpush1.bf16.msra.mxu0 0
    %139 = vmatprep.subr.bf16.mxu0 0
    %140 = vmatpush1.bf16.msra.mxu0 0
    %141 = vmatprep.subr.bf16.mxu0 0
    %142 = vmatpush1.bf16.msra.mxu0 0
    %143 = vmatprep.subr.bf16.mxu0 0
    %144 = vmatpush1.bf16.msra.mxu0 0
    %145 = vmatprep.subr.bf16.mxu0 0
    %146 = vmatpush1.bf16.msra.mxu0 0
    %147 = vmatprep.subr.bf16.mxu0 0
    %148 = vmatpush1.bf16.msra.mxu0 0
    %149 = vmatprep.subr.bf16.mxu0 0
    %150 = vmatpush1.bf16.msra.mxu0 0
    %151 = vmatprep.subr.bf16.mxu0 0
    %152 = vmatpush1.bf16.msra.mxu0 0
    %153 = vmatprep.subr.bf16.mxu0 0
    %154 = vmatpush1.bf16.msra.mxu0 0
    %155 = vmatprep.subr.bf16.mxu0 0
    %156 = vmatpush1.bf16.msra.mxu0 0
    %157 = vmatprep.subr.bf16.mxu0 0
    %158 = vmatpush1.bf16.msra.mxu0 0
    %159 = vmatprep.subr.bf16.mxu0 0
    %160 = vmatpush1.bf16.msra.mxu0 0
    %161 = vmatprep.subr.bf16.mxu0 0
    %162 = vmatpush1.bf16.msra.mxu0 0
    %163 = vmatprep.mubr.bf16.mxu0 0
    %164 = vmatmul.mubr.bf16.gmra.mrb[0].mxu0 %v129
    %v165 = vpop.f32.mrb[0].mxu0
    %v166 = vadd.f32 %v108, %v165
    %v167 = vpop.f32.mrb[0].mxu0
    %v168 = vpop.f32.mrb[0].mxu0
    %v169 = vadd.f32 %v108, %v168
    %v170 = vpop.f32.mrb[0].mxu0
    %171 = vdwg.mxu0
    %v172 = vtanh.pop %v166
    %v173 = vtanh.pop %v169
    %v174 = vpack.c.bf16 %v172, %v172
    %v175 = vld [vmem:[#allocation5] sm:$0xf]
    %v177 = vsel %vm127, %v174, 0
    %v180 = vsel %vm127, %v175, 0
    %182 = vmatprep.subr.bf16.mxu0 0
    %183 = vmatpush1.bf16.xpose.msra.mxu0 %v180
    %184 = vmatprep.subr.bf16.mxu0 0
    %185 = vmatpush1.bf16.xpose.msra.mxu0 0
    %186 = vmatprep.subr.bf16.mxu0 0
    %187 = vmatpush1.bf16.xpose.msra.mxu0 0
    %188 = vmatprep.subr.bf16.mxu0 0
    %189 = vmatpush1.bf16.xpose.msra.mxu0 0
    %190 = vmatprep.subr.bf16.mxu0 0
    %191 = vmatpush1.bf16.xpose.msra.mxu0 0
    %192 = vmatprep.subr.bf16.mxu0 0
    %193 = vmatpush1.bf16.xpose.msra.mxu0 0
    %194 = vmatprep.subr.bf16.mxu0 0
    %195 = vmatpush1.bf16.xpose.msra.mxu0 0
    %196 = vmatprep.subr.bf16.mxu0 0
    %197 = vmatpush1.bf16.xpose.msra.mxu0 0
    %198 = vmatprep.subr.bf16.mxu0 0
    %199 = vmatpush1.bf16.xpose.msra.mxu0 0
    %200 = vmatprep.subr.bf16.mxu0 0
    %201 = vmatpush1.bf16.xpose.msra.mxu0 0
    %202 = vmatprep.subr.bf16.mxu0 0
    %203 = vmatpush1.bf16.xpose.msra.mxu0 0
    %204 = vmatprep.subr.bf16.mxu0 0
    %205 = vmatpush1.bf16.xpose.msra.mxu0 0
    %206 = vmatprep.subr.bf16.mxu0 0
    %207 = vmatpush1.bf16.xpose.msra.mxu0 0
    %208 = vmatprep.subr.bf16.mxu0 0
    %209 = vmatpush1.bf16.xpose.msra.mxu0 0
    %210 = vmatprep.subr.bf16.mxu0 0
    %211 = vmatpush1.bf16.xpose.msra.mxu0 0
    %212 = vmatprep.subr.bf16.mxu0 0
    %213 = vmatpush1.bf16.xpose.msra.mxu0 0
    %214 = vmatprep.mubr.bf16.mxu0 0
    %215 = vmatmul.mubr.bf16.gmra.mrb[0].mxu0 %v177
    %v216 = vpop.f32.mrb[0].mxu0
    %v217 = vadd.f32 0.0, %v216
    %v218 = vpop.f32.mrb[0].mxu0
    %v219 = vpop.f32.mrb[0].mxu0
    %v220 = vpop.f32.mrb[0].mxu0
    %221 = vdwg.mxu0
    %v222 = vxor.u32 %v217, 2147483648
    %v223 = vmul.f32 %v222, 1.442695
    %v224 = vpow.pop %v223
    %v225 = vadd.f32 %v224, 1.0
    %v226 = vrcp.pop %v225
    %v227 = vmul.f32 1.0, %v226
    %vm228 = vcmask 64512
    %229 = vst.msk [vmem:[#allocation11] sm:$0xff] %vm228, %v227
    %v230 = vld [vmem:[#allocation10] sm:$0xf]
    %v231 = vunpack.c.l.bf16 %v230
    %v232 = vmul.f32 %v231, 2.0
    %v233 = vsub.f32 1.0, %v232
    %v234 = vmul.f32 %v227, 2.0
    %v235 = vsub.f32 %v234, 1.0
    %v236 = vmul.f32 %v233, %v235
    %v237 = vmul.f32 %v236, 1.442695
    %v238 = vpow.pop %v237
    %v239 = vadd.f32 %v238, 1.0
    %v240 = vlog2.pop %v239
    %v241 = vmul.f32 %v240, 0.6931472
    %v242 = vsel %vm228, %v241, 0.0
    %v243 = vrot.slane %v242, 4
    %v244 = vadd.f32 %v242, %v243
    %v245 = vrot.slane %v244, 2
    %v246 = vadd.f32 %v244, %v245
    %v247 = vrot.slane %v246, 1
    %v248 = vadd.f32 %v246, %v247
    %v249 = vadd.f32 %v248, 0.0
    %v250 = vpack.c.bf16 %v173, %v173
    %v251 = vld [vmem:[#allocation5 + $0x4] sm:$0xf]
    %v253 = vsel %vm127, %v250, 0
    %v256 = vsel %vm127, %v251, 0
    %258 = vmatprep.subr.bf16.mxu0 0
    %259 = vmatpush1.bf16.xpose.msra.mxu0 %v256
    %260 = vmatprep.subr.bf16.mxu0 0
    %261 = vmatpush1.bf16.xpose.msra.mxu0 0
    %262 = vmatprep.subr.bf16.mxu0 0
    %263 = vmatpush1.bf16.xpose.msra.mxu0 0
    %264 = vmatprep.subr.bf16.mxu0 0
    %265 = vmatpush1.bf16.xpose.msra.mxu0 0
    %266 = vmatprep.subr.bf16.mxu0 0
    %267 = vmatpush1.bf16.xpose.msra.mxu0 0
    %268 = vmatprep.subr.bf16.mxu0 0
    %269 = vmatpush1.bf16.xpose.msra.mxu0 0
    %270 = vmatprep.subr.bf16.mxu0 0
    %271 = vmatpush1.bf16.xpose.msra.mxu0 0
    %272 = vmatprep.subr.bf16.mxu0 0
    %273 = vmatpush1.bf16.xpose.msra.mxu0 0
    %274 = vmatprep.subr.bf16.mxu0 0
    %275 = vmatpush1.bf16.xpose.msra.mxu0 0
    %276 = vmatprep.subr.bf16.mxu0 0
    %277 = vmatpush1.bf16.xpose.msra.mxu0 0
    %278 = vmatprep.subr.bf16.mxu0 0
    %279 = vmatpush1.bf16.xpose.msra.mxu0 0
    %280 = vmatprep.subr.bf16.mxu0 0
    %281 = vmatpush1.bf16.xpose.msra.mxu0 0
    %282 = vmatprep.subr.bf16.mxu0 0
    %283 = vmatpush1.bf16.xpose.msra.mxu0 0
    %284 = vmatprep.subr.bf16.mxu0 0
    %285 = vmatpush1.bf16.xpose.msra.mxu0 0
    %286 = vmatprep.subr.bf16.mxu0 0
    %287 = vmatpush1.bf16.xpose.msra.mxu0 0
    %288 = vmatprep.subr.bf16.mxu0 0
    %289 = vmatpush1.bf16.xpose.msra.mxu0 0
    %290 = vmatprep.mubr.bf16.mxu0 0
    %291 = vmatmul.mubr.bf16.gmra.mrb[0].mxu0 %v253
    %v292 = vpop.f32.mrb[0].mxu0
    %v293 = vadd.f32 0.0, %v292
    %v294 = vpop.f32.mrb[0].mxu0
    %v295 = vpop.f32.mrb[0].mxu0
    %v296 = vpop.f32.mrb[0].mxu0
    %297 = vdwg.mxu0
    %v298 = vxor.u32 %v293, 2147483648
    %v299 = vmul.f32 %v298, 1.442695
    %v300 = vpow.pop %v299
    %v301 = vadd.f32 %v300, 1.0
    %v302 = vrcp.pop %v301
    %v303 = vmul.f32 1.0, %v302
    %s304 = scalar_lea.vmem [#allocation11], 8
    %305 = vst.msk [vmem:[%s304] sm:$0xff] %vm228, %v303
    %s306 = scalar_lea.vmem [#allocation10], 4
    %v307 = vld [vmem:[%s306] sm:$0xf]
    %v308 = vunpack.c.l.bf16 %v307
    %v309 = vmul.f32 %v308, 2.0
    %v310 = vsub.f32 1.0, %v309
    %v311 = vmul.f32 %v303, 2.0
    %v312 = vsub.f32 %v311, 1.0
    %v313 = vmul.f32 %v310, %v312
    %v314 = vmul.f32 %v313, 1.442695
    %v315 = vpow.pop %v314
    %v316 = vadd.f32 %v315, 1.0
    %v317 = vlog2.pop %v316
    %v318 = vmul.f32 %v317, 0.6931472
    %v319 = vsel %vm228, %v318, 0.0
    %v320 = vrot.slane %v319, 4
    %v321 = vadd.f32 %v319, %v320
    %v322 = vrot.slane %v321, 2
    %v323 = vadd.f32 %v321, %v322
    %v324 = vrot.slane %v323, 1
    %v325 = vadd.f32 %v323, %v324
    %v326 = vadd.f32 %v249, %v325
    %vm327 = vcmask 57344
    %328 = vst.msk [vmem:[#allocation12] sm:$0x1] %vm327, %v326
    // Predicated region
    $region42: #{tpu_custom_call.1} parent=1 // pred_check
      _
    $region43: #{tpu_custom_call.1} parent=1 // pred_check_branch
      %330 = sbr.rel (0) target = $region45
    $region44: #{tpu_custom_call.1} parent=1 // pred_region
      %s332 = ssub.s32 256, 256
      %333 = vsyncadd [#allocation4], %s332
      %s334 = sshll.u32 [#allocation11], 4
      %s335 = int_to_ptr.vmem [resolvable:$true] %s334
      %340 = dma.vmem_to_hbm [thread:$0]  %s335, 256, %s5, [#allocation4], 128, 128, 8
    $region45: #{tpu_custom_call.1} parent=1 // pred_fallthru
      _
    // Predicated region
    $region46: #{tpu_custom_call.1} parent=1 // pred_check
      _
    $region47: #{tpu_custom_call.1} parent=1 // pred_check_branch
      %342 = sbr.rel (0) target = $region49
    $region48: #{tpu_custom_call.1} parent=1 // pred_region
      %s344 = ssub.s32 16, 16
      %345 = vsyncadd [#allocation13], %s344
      %s347 = sshll.u32 [#allocation12], 4
      %s348 = int_to_ptr.vmem [resolvable:$true] %s347
      %350 = dma.vmem_to_hbm [thread:$0]  %s348, 16, %s6, [#allocation13]
    $region49: #{tpu_custom_call.1} parent=1 // pred_fallthru
      _
    // Predicated region
    $region50: #{tpu_custom_call.1} parent=1 // pred_check
      _
    $region51: #{tpu_custom_call.1} parent=1 // pred_check_branch
      %352 = sbr.rel (0) target = $region53
    $region52: #{tpu_custom_call.1} parent=1 // pred_region
      %353 = dma.done [#allocation4], 256
    $region53: #{tpu_custom_call.1} parent=1 // pred_fallthru
      _
    // Predicated region
    $region54: #{tpu_custom_call.1} parent=1 // pred_check
      _
    $region55: #{tpu_custom_call.1} parent=1 // pred_check_branch
      %355 = sbr.rel (0) target = $region57
    $region56: #{tpu_custom_call.1} parent=1 // pred_region
      %356 = dma.done [#allocation13], 16
    $region57: #{tpu_custom_call.1} parent=1 // pred_fallthru
      _
    %357 = vsyncpa [#allocation3], 1
    %358 = vsyncpa [#allocation6], 1
    %359 = vsyncpa [#allocation9], 1
    %360 = vsyncpa [#allocation4], 1
    %361 = vsyncpa [#allocation13], 1

</llo_original>
